<compile_context>
chip_gen: v7x
topology: tpu7x:2x2x1
jax: 0.10.0
libtpu: 0.0.40
codegen_flags: <defaults>
</compile_context>

<pallas_src>
import jax
import jax.numpy as jnp
from jax.experimental import pallas as pl
from jax.experimental.pallas import tpu as pltpu

LANE = 128          # TPU lane width
_NEG_INF = -1e30    # padded-class bias -> softmax prob underflows to exactly 0


def _round_up(x, m):
    return (x + m - 1) // m * m


def dcd_kernel(x_ref, w1_ref, b1_ref, w23_ref, b23_ref, o_ref):
    f32, bf16 = jnp.float32, jnp.bfloat16

    # fc1 + ReLU  (bf16 operands, f32 MXU accumulation; elementwise in f32)
    xb = x_ref[...].astype(bf16)                                      # (tb, D_in)
    h1 = jnp.dot(xb, w1_ref[...], preferred_element_type=f32) + b1_ref[...]
    h1 = jnp.maximum(h1, 0.0)

    # fused fc2·out -> lane-padded logits (padded class biases are -1e30)
    logits = jnp.dot(h1.astype(bf16), w23_ref[...],
                     preferred_element_type=f32) + b23_ref[...]

    # softmax over dim=1; padded columns contribute exactly 0 to the sum
    m = jnp.max(logits, axis=1, keepdims=True)
    e = jnp.exp(logits - m)
    denom = jnp.sum(e, axis=1, keepdims=True)
    probs = e / denom                                                 # exact normalization

    # store only the real classes (output last dim == full array dim)
    o_ref[...] = probs[:, : o_ref.shape[1]].astype(o_ref.dtype)


def dcd_prepare_weights(w1, b1, w2, b2, w3, b3):
    """One-time weight prep: fuse fc2·out exactly in f32, pad to lane width, cast bf16."""
    f32, bf16 = jnp.float32, jnp.bfloat16
    w1 = jnp.asarray(w1, f32)
    w2 = jnp.asarray(w2, f32)
    w3 = jnp.asarray(w3, f32)
    b1 = jnp.asarray(b1, f32).reshape(1, -1)
    b2 = jnp.asarray(b2, f32).reshape(1, -1)
    b3 = jnp.asarray(b3, f32).reshape(1, -1)

    H = w1.shape[1]
    C = w3.shape[1]

    # Exact fusion in f32 (no activation between fc2 and the output layer).
    w23 = w2 @ w3                    # (H, C)
    b23 = b2 @ w3 + b3               # (1, C)

    Hp = _round_up(H, LANE)
    Cp = _round_up(C, LANE)

    w1p = jnp.pad(w1, ((0, 0), (0, Hp - H))).astype(bf16)
    b1p = jnp.pad(b1, ((0, 0), (0, Hp - H)))
    w23p = jnp.pad(w23, ((0, Hp - H), (0, Cp - C))).astype(bf16)   # zero pad cols
    b23p = jnp.pad(b23, ((0, 0), (0, Cp - C)), constant_values=_NEG_INF)
    return (w1p, b1p, w23p, b23p), C


def dcd_forward(x, prepared, *, num_classes, tb=None):
    """x: (B, D_in) float32. Returns (B, num_classes) softmax probs (f32)."""
    w1p, b1p, w23p, b23p = prepared
    x = jnp.asarray(x, jnp.float32)
    B, D_in = x.shape
    Hp = w1p.shape[1]
    Cp = w23p.shape[1]
    C = int(num_classes)
    f32 = jnp.float32

    # ---- batch tile: big tiles amortize ~0.35us/step; >=2 steps for big B (v7x) ----
    if tb is None:
        if B > 2048:
            tb = min(2048, _round_up(pl.cdiv(B, 2), 128))
        else:
            tb = B                       # single step, block == full batch dim
    tb = int(min(tb, B))
    if tb != B:
        tb = _round_up(tb, 8)
        if tb >= B:
            tb = B
    grid = (pl.cdiv(B, tb),)             # ragged last tile handled by Pallas masking

    # ---- advisory cost estimate for the XLA scheduler ----
    flops = 2 * B * (D_in * Hp + Hp * Cp)
    bytes_accessed = (x.size * 4 + (w1p.size + w23p.size) * 2
                      + (b1p.size + b23p.size) * 4 + B * C * 4)
    cost = pl.CostEstimate(flops=flops, transcendentals=B * Cp,
                           bytes_accessed=bytes_accessed)

    # ---- generation-aware VMEM budget (resident weights + streamed tiles + temps) ----
    weights_bytes = (w1p.size + w23p.size) * 2 + (b1p.size + b23p.size) * 4
    stream_bytes = 2 * tb * D_in * 4 + 2 * tb * LANE * 4      # x / out, double-buffered
    interm_bytes = tb * Hp * (4 + 2) + 2 * tb * Cp * 4        # h1 (f32 + bf16), logits, e
    vmem_bytes = weights_bytes + stream_bytes + interm_bytes
    try:
        vmem_cap = int(pltpu.get_tpu_info().vmem_capacity_bytes)
    except Exception:
        vmem_cap = 64 * 2**20                                 # conservative (v7x per-TC)
    vmem_limit = int(min(int(0.75 * vmem_cap), max(8 * 2**20, 2 * vmem_bytes)))

    return pl.pallas_call(
        dcd_kernel,
        out_shape=jax.ShapeDtypeStruct((B, C), f32),
        grid=grid,
        in_specs=[
            pl.BlockSpec((tb, D_in), lambda i: (i, 0)),   # x tile (streams, f32)
            pl.BlockSpec((D_in, Hp), lambda i: (0, 0)),   # w1 (VMEM-resident)
            pl.BlockSpec((1, Hp),    lambda i: (0, 0)),   # b1
            pl.BlockSpec((Hp, Cp),   lambda i: (0, 0)),   # fused w2@w3 (resident)
            pl.BlockSpec((1, Cp),    lambda i: (0, 0)),   # fused bias (-1e30 padded)
        ],
        out_specs=pl.BlockSpec((tb, C), lambda i: (i, 0)),  # only real classes stored
        compiler_params=pltpu.CompilerParams(
            dimension_semantics=("parallel",),
            vmem_limit_bytes=vmem_limit),
        cost_estimate=cost,
    )(x, w1p, b1p, w23p, b23p)


def reference_forward(x, w1, b1, w2, b2, w3, b3):
    """True module semantics (unfused, f32) for validation."""
    h1 = jnp.maximum(x @ w1 + b1, 0.0)
    h2 = h1 @ w2 + b2
    logits = h2 @ w3 + b3
    return jax.nn.softmax(logits, axis=1)


if __name__ == "__main__":
    # Module defaults: fc1 = Linear(200, 100), fc2 = Linear(100, 100), out = Linear(100, 4)
    H, D_in, C = 100, 200, 4
    B = 8

    key = jax.random.PRNGKey(0)
    kx, k1, kb1, k2, kb2, k3, kb3, kx2 = jax.random.split(key, 8)

    def init_linear(kw, kb, fan_in, fan_out):
        bound = 1.0 / jnp.sqrt(fan_in)
        w = jax.random.uniform(kw, (fan_in, fan_out), minval=-bound, maxval=bound,
                               dtype=jnp.float32)
        b = jax.random.uniform(kb, (1, fan_out), minval=-bound, maxval=bound,
                               dtype=jnp.float32)
        return w, b

    w1, b1 = init_linear(k1, kb1, D_in, H)
    w2, b2 = init_linear(k2, kb2, H, H)
    w3, b3 = init_linear(k3, kb3, H, C)

    x = jax.random.normal(kx, (B, D_in), dtype=jnp.float32)

    # Weight prep (fc2·out fusion + lane padding + bf16 cast) is hoisted: done once.
    prepared, num_classes = dcd_prepare_weights(w1, b1, w2, b2, w3, b3)
    prepared = jax.tree_util.tree_map(jax.block_until_ready, prepared)

    fwd = jax.jit(dcd_forward, static_argnames=("num_classes", "tb"))

    # --- single-tile path (block == full batch) ---
    out = fwd(x, prepared, num_classes=num_classes)
    jax.block_until_ready(out)
    ref = reference_forward(x, w1, b1, w2, b2, w3, b3)
    assert out.shape == (B, C)
    assert bool(jnp.all(jnp.isfinite(out)))
    assert jnp.allclose(out, ref, atol=1e-2, rtol=1e-2)
    assert jnp.allclose(jnp.sum(out, axis=1), jnp.ones((B,)), atol=1e-4)

    # --- multi-step grid with a ragged last tile (no wrapper-side batch padding) ---
    B2 = 300
    x2 = jax.random.normal(kx2, (B2, D_in), dtype=jnp.float32)
    out2 = fwd(x2, prepared, num_classes=num_classes, tb=128)   # 3 steps, last partial
    jax.block_until_ready(out2)
    ref2 = reference_forward(x2, w1, b1, w2, b2, w3, b3)
    assert out2.shape == (B2, C)
    assert jnp.allclose(out2, ref2, atol=1e-2, rtol=1e-2)
    assert jnp.allclose(jnp.sum(out2, axis=1), jnp.ones((B2,)), atol=1e-4)

    print("KERNEL_OK")
</pallas_src>

<mosaic_0001>
module attributes {stable_mosaic.version = 11 : i64} {
  func.func @dcd_kernel(%arg0: i32, %arg1: memref<8x200xf32, #tpu.memory_space<vmem>>, %arg2: memref<200x128xbf16, #tpu.memory_space<vmem>>, %arg3: memref<1x128xf32, #tpu.memory_space<vmem>>, %arg4: memref<128x128xbf16, #tpu.memory_space<vmem>>, %arg5: memref<1x128xf32, #tpu.memory_space<vmem>>, %arg6: memref<8x4xf32, #tpu.memory_space<vmem>>) attributes {dimension_semantics = [#tpu.dimension_semantics<parallel>], iteration_bounds = array<i64: 1>, scalar_prefetch = 0 : i64, scratch_operands = 0 : i64, tpu.core_type = #tpu.core_type<tc>, window_params = [{transform_indices = @transform_0, window_bounds = array<i64: 8, 200>}, {pipeline_mode = #tpu.pipeline_mode<synchronous>, transform_indices = @transform_1, window_bounds = array<i64: 200, 128>}, {pipeline_mode = #tpu.pipeline_mode<synchronous>, transform_indices = @transform_2, window_bounds = array<i64: 1, 128>}, {pipeline_mode = #tpu.pipeline_mode<synchronous>, transform_indices = @transform_3, window_bounds = array<i64: 128, 128>}, {pipeline_mode = #tpu.pipeline_mode<synchronous>, transform_indices = @transform_4, window_bounds = array<i64: 1, 128>}, {transform_indices = @transform_5, window_bounds = array<i64: 8, 4>}]} {
    %c0 = arith.constant 0 : index
    %c0_0 = arith.constant 0 : index
    %0 = vector.load %arg1[%c0, %c0_0] : memref<8x200xf32, #tpu.memory_space<vmem>>, vector<8x200xf32>
    %1 = arith.truncf %0 : vector<8x200xf32> to vector<8x200xbf16>
    %c0_1 = arith.constant 0 : index
    %c0_2 = arith.constant 0 : index
    %2 = vector.load %arg2[%c0_1, %c0_2] : memref<200x128xbf16, #tpu.memory_space<vmem>>, vector<200x128xbf16>
    %cst = arith.constant dense<0.000000e+00> : vector<8x128xf32>
    %3 = tpu.matmul %1, %2, %cst {dimension_numbers = #tpu.dot_dimension_numbers<[1], [0], [0], [1], [0, 0, 1, 1], [], []>} : vector<8x200xbf16>, vector<200x128xbf16>, vector<8x128xf32> -> vector<8x128xf32>
    %c0_3 = arith.constant 0 : index
    %c0_4 = arith.constant 0 : index
    %4 = vector.load %arg3[%c0_3, %c0_4] : memref<1x128xf32, #tpu.memory_space<vmem>>, vector<1x128xf32>
    %5 = vector.broadcast %4 : vector<1x128xf32> to vector<8x128xf32>
    %6 = arith.addf %3, %5 : vector<8x128xf32>
    %cst_5 = arith.constant 0.000000e+00 : f32
    %7 = vector.broadcast %cst_5 : f32 to vector<8x128xf32>
    %8 = arith.maximumf %6, %7 : vector<8x128xf32>
    %9 = arith.truncf %8 : vector<8x128xf32> to vector<8x128xbf16>
    %c0_6 = arith.constant 0 : index
    %c0_7 = arith.constant 0 : index
    %10 = vector.load %arg4[%c0_6, %c0_7] : memref<128x128xbf16, #tpu.memory_space<vmem>>, vector<128x128xbf16>
    %cst_8 = arith.constant dense<0.000000e+00> : vector<8x128xf32>
    %11 = tpu.matmul %9, %10, %cst_8 {dimension_numbers = #tpu.dot_dimension_numbers<[1], [0], [0], [1], [0, 0, 1, 1], [], []>} : vector<8x128xbf16>, vector<128x128xbf16>, vector<8x128xf32> -> vector<8x128xf32>
    %c0_9 = arith.constant 0 : index
    %c0_10 = arith.constant 0 : index
    %12 = vector.load %arg5[%c0_9, %c0_10] : memref<1x128xf32, #tpu.memory_space<vmem>>, vector<1x128xf32>
    %13 = vector.broadcast %12 : vector<1x128xf32> to vector<8x128xf32>
    %14 = arith.addf %11, %13 : vector<8x128xf32>
    %cst_11 = arith.constant dense<0xFF800000> : vector<8xf32>
    %15 = vector.multi_reduction <maximumf>, %14, %cst_11 [1] : vector<8x128xf32> to vector<8xf32>
    %16 = vector.shape_cast %15 : vector<8xf32> to vector<8x1xf32>
    %17 = vector.broadcast %16 : vector<8x1xf32> to vector<8x128xf32>
    %18 = arith.subf %14, %17 : vector<8x128xf32>
    %19 = math.exp %18 : vector<8x128xf32>
    %cst_12 = arith.constant dense<0.000000e+00> : vector<8xf32>
    %20 = vector.multi_reduction <add>, %19, %cst_12 [1] : vector<8x128xf32> to vector<8xf32>
    %21 = vector.shape_cast %20 : vector<8xf32> to vector<8x1xf32>
    %22 = vector.broadcast %21 : vector<8x1xf32> to vector<8x128xf32>
    %23 = arith.divf %19, %22 : vector<8x128xf32>
    %24 = vector.extract_strided_slice %23 {offsets = [0, 0], sizes = [8, 4], strides = [1, 1]} : vector<8x128xf32> to vector<8x4xf32>
    %c0_13 = arith.constant 0 : index
    %c0_14 = arith.constant 0 : index
    %25 = vector.load %arg6[%c0_13, %c0_14] : memref<8x4xf32, #tpu.memory_space<vmem>>, vector<8x4xf32>
    tpu.vector_store %arg6[%c0_13, %c0_14], %24 {strides = array<i32>} : memref<8x4xf32, #tpu.memory_space<vmem>>, vector<8x4xf32>,
    return
  }
  func.func @transform_0(%arg0: i32) -> (i32, i32) {
    %c0_i32 = arith.constant 0 : i32
    %c0_i32_0 = arith.constant 0 : i32
    return %arg0, %c0_i32 : i32, i32
  }
  func.func @transform_1(%arg0: i32) -> (i32, i32) {
    %c0_i32 = arith.constant 0 : i32
    %c0_i32_0 = arith.constant 0 : i32
    %c0_i32_1 = arith.constant 0 : i32
    return %c0_i32, %c0_i32_0 : i32, i32
  }
  func.func @transform_2(%arg0: i32) -> (i32, i32) {
    %c0_i32 = arith.constant 0 : i32
    %c0_i32_0 = arith.constant 0 : i32
    %c0_i32_1 = arith.constant 0 : i32
    return %c0_i32, %c0_i32_0 : i32, i32
  }
  func.func @transform_3(%arg0: i32) -> (i32, i32) {
    %c0_i32 = arith.constant 0 : i32
    %c0_i32_0 = arith.constant 0 : i32
    %c0_i32_1 = arith.constant 0 : i32
    return %c0_i32, %c0_i32_0 : i32, i32
  }
  func.func @transform_4(%arg0: i32) -> (i32, i32) {
    %c0_i32 = arith.constant 0 : i32
    %c0_i32_0 = arith.constant 0 : i32
    %c0_i32_1 = arith.constant 0 : i32
    return %c0_i32, %c0_i32_0 : i32, i32
  }
  func.func @transform_5(%arg0: i32) -> (i32, i32) {
    %c0_i32 = arith.constant 0 : i32
    %c0_i32_0 = arith.constant 0 : i32
    return %arg0, %c0_i32 : i32, i32
  }
}

</mosaic_0001>

<llo_original>
// kernel: dcd_forward.1
$region0: #{dcd_forward.1}
  #allocation0 [shape = 'u32[]', space=smem, size = 0x4, offset = 0x4, fixed_abs, tag = 'smem constant byte address 0x4 - core index']
  #allocation1 [shape = 'u32[144,128]{1,0:T(1,128)}', space=vmem, size = 0x12000, scoped, tag = 'internal scratch']
  %s0 = inlined_call_operand.hbm [shape: f32[8,200], index: 0, kind: input, shape index: {}]
  %s1 = inlined_call_operand.hbm [shape: bf16[200,128], index: 1, kind: input, shape index: {}]
  %s2 = inlined_call_operand.vmem [shape: f32[1,128], index: 2, kind: input, shape index: {}]
  %s3 = inlined_call_operand.hbm [shape: bf16[128,128], index: 3, kind: input, shape index: {}]
  %s4 = inlined_call_operand.vmem [shape: f32[1,128], index: 4, kind: input, shape index: {}]
  %s5 = inlined_call_operand.vmem [shape: f32[8,4], index: 5, kind: output, shape index: {}]
  %s6 = sld [smem:[#allocation0]]
  $region42: #{dcd_forward.1} parent=0
    _
  %s8 = ssub.s32 1, %s6
  %s9 = scalar_select 0, %s8, %s6
  $region1: #{dcd_forward.1} parent=0
    #allocation2 [shape = 'u8[8192]{0}', space=vmem, size = 0x2000, scoped, tag = 'input window, operand 0, single buffered']
    #allocation3 [shape = 's32[1]{0}', space=sflag, size = 0x4, scoped, tag = 'scoped memory for dcd_forward.1']
    #allocation4 [shape = 'u8[51200]{0}', space=vmem, size = 0xc800, scoped, tag = 'input window, operand 1, single buffered']
    #allocation5 [shape = 's32[1]{0}', space=sflag, size = 0x4, scoped, tag = 'scoped memory for dcd_forward.1']
    #allocation6 [shape = 'u8[32768]{0}', space=vmem, size = 0x8000, scoped, tag = 'input window, operand 3, single buffered']
    %10 = vsyncpa [#allocation3], 0
    %11 = vsyncpa [#allocation5], 0
    // Predicated region
    $region2: #{dcd_forward.1} parent=1 // pred_check
      _
    $region3: #{dcd_forward.1} parent=1 // pred_check_branch
      %13 = sbr.rel (0) target = $region5
    $region4: #{dcd_forward.1} parent=1 // pred_region
      %s15 = ssub.s32 256, 256
      %16 = vsyncadd [#allocation3], %s15
      %s18 = sshll.u32 [#allocation2], 4
      %s19 = int_to_ptr.vmem [resolvable:$true] %s18
      %21 = dma.hbm_to_vmem [thread:$0]  %s0, 256, %s19, [#allocation3]
    $region5: #{dcd_forward.1} parent=1 // pred_fallthru
      _
    // Predicated region
    $region6: #{dcd_forward.1} parent=1 // pred_check
      _
    $region7: #{dcd_forward.1} parent=1 // pred_check_branch
      %23 = sbr.rel (0) target = $region9
    $region8: #{dcd_forward.1} parent=1 // pred_region
      %s25 = ssub.s32 1600, 1600
      %26 = vsyncadd [#allocation5], %s25
      %s27 = sshll.u32 [#allocation4], 4
      %s28 = int_to_ptr.vmem [resolvable:$true] %s27
      %33 = dma.hbm_to_vmem [thread:$0]  %s1, 1600, %s28, [#allocation5], 64, 64, 4
    $region9: #{dcd_forward.1} parent=1 // pred_fallthru
      _
    // Predicated region
    $region10: #{dcd_forward.1} parent=1 // pred_check
      _
    $region11: #{dcd_forward.1} parent=1 // pred_check_branch
      %35 = sbr.rel (0) target = $region13
    $region12: #{dcd_forward.1} parent=1 // pred_region
      _
    $region13: #{dcd_forward.1} parent=1 // pred_fallthru
      _
    // Predicated region
    $region14: #{dcd_forward.1} parent=1 // pred_check
      _
    $region15: #{dcd_forward.1} parent=1 // pred_check_branch
      %37 = sbr.rel (0) target = $region17
    $region16: #{dcd_forward.1} parent=1 // pred_region
      %s39 = ssub.s32 1024, 1024
      %40 = vsyncadd [#allocation5], %s39
      %s41 = sshll.u32 [#allocation6], 4
      %s42 = int_to_ptr.vmem [resolvable:$true] %s41
      %47 = dma.hbm_to_vmem [thread:$0]  %s3, 1024, %s42, [#allocation5], 64, 64, 4
    $region17: #{dcd_forward.1} parent=1 // pred_fallthru
      _
    // Predicated region
    $region18: #{dcd_forward.1} parent=1 // pred_check
      _
    $region19: #{dcd_forward.1} parent=1 // pred_check_branch
      %49 = sbr.rel (0) target = $region21
    $region20: #{dcd_forward.1} parent=1 // pred_region
      _
    $region21: #{dcd_forward.1} parent=1 // pred_fallthru
      _
    // Predicated region
    $region22: #{dcd_forward.1} parent=1 // pred_check
      _
    $region23: #{dcd_forward.1} parent=1 // pred_check_branch
      %51 = sbr.rel (0) target = $region25
    $region24: #{dcd_forward.1} parent=1 // pred_region
      %52 = dma.done [#allocation3], 256
    $region25: #{dcd_forward.1} parent=1 // pred_fallthru
      _
    // Predicated region
    $region26: #{dcd_forward.1} parent=1 // pred_check
      _
    $region27: #{dcd_forward.1} parent=1 // pred_check_branch
      %54 = sbr.rel (0) target = $region29
    $region28: #{dcd_forward.1} parent=1 // pred_region
      %55 = dma.done [#allocation5], 1600
    $region29: #{dcd_forward.1} parent=1 // pred_fallthru
      _
    // Predicated region
    $region30: #{dcd_forward.1} parent=1 // pred_check
      _
    $region31: #{dcd_forward.1} parent=1 // pred_check_branch
      %57 = sbr.rel (0) target = $region33
    $region32: #{dcd_forward.1} parent=1 // pred_region
      %58 = dma.done [#allocation5], 1024
    $region33: #{dcd_forward.1} parent=1 // pred_fallthru
      _
    %v60 = vld [vmem:[#allocation2] sm:$0xff]
    %v61 = vld [vmem:[#allocation2 + $0x8] sm:$0xff]
    %v62 = vpack.c.bf16 %v60, %v60
    %v63 = vpack.c.bf16 %v61, %v61
    %v64 = vld [vmem:[#allocation4] sm:$0xf]
    %v65 = vld [vmem:[#allocation4 + $0x4] sm:$0xf]
    %v66 = vld [vmem:[#allocation4 + $0x8] sm:$0xf]
    %v67 = vld [vmem:[#allocation4 + $0xc] sm:$0xf]
    %v68 = vld [vmem:[#allocation4 + $0x10] sm:$0xf]
    %v69 = vld [vmem:[#allocation4 + $0x14] sm:$0xf]
    %v70 = vld [vmem:[#allocation4 + $0x18] sm:$0xf]
    %v71 = vld [vmem:[#allocation4 + $0x1c] sm:$0xf]
    %v72 = vld [vmem:[#allocation4 + $0x20] sm:$0xf]
    %v73 = vld [vmem:[#allocation4 + $0x24] sm:$0xf]
    %v74 = vld [vmem:[#allocation4 + $0x28] sm:$0xf]
    %v75 = vld [vmem:[#allocation4 + $0x2c] sm:$0xf]
    %v76 = vld [vmem:[#allocation4 + $0x30] sm:$0xf]
    %v77 = vld [vmem:[#allocation4 + $0x34] sm:$0xf]
    %v78 = vld [vmem:[#allocation4 + $0x38] sm:$0xf]
    %v79 = vld [vmem:[#allocation4 + $0x3c] sm:$0xf]
    %v80 = vld [vmem:[#allocation4 + $0x40] sm:$0xf]
    %v81 = vld [vmem:[#allocation4 + $0x44] sm:$0xf]
    %v82 = vld [vmem:[#allocation4 + $0x48] sm:$0xf]
    %v83 = vld [vmem:[#allocation4 + $0x4c] sm:$0xf]
    %v84 = vld [vmem:[#allocation4 + $0x50] sm:$0xf]
    %v85 = vld [vmem:[#allocation4 + $0x54] sm:$0xf]
    %v86 = vld [vmem:[#allocation4 + $0x58] sm:$0xf]
    %v87 = vld [vmem:[#allocation4 + $0x5c] sm:$0xf]
    %v88 = vld [vmem:[#allocation4 + $0x60] sm:$0xf]
    %v89 = vld [vmem:[%s2] sm:$0x1]
    %v91 = vlaneseq
    %v92 = vshrl.u32 %v91, 7
    %v93 = vsub.s32 0, %v92
    %v94 = vrot.slane %v89, %v93
    %v121 = vunpack.c.l.b16 %v64
    %v122 = vunpack.c.l.b16 %v65
    %v123 = vunpack.c.l.b16 %v66
    %v124 = vunpack.c.l.b16 %v67
    %v125 = vunpack.c.l.b16 %v68
    %v126 = vunpack.c.l.b16 %v69
    %v127 = vunpack.c.l.b16 %v70
    %v128 = vunpack.c.l.b16 %v71
    %v129 = vunpack.c.l.b16 %v72
    %v130 = vunpack.c.l.b16 %v73
    %v131 = vunpack.c.l.b16 %v74
    %v132 = vunpack.c.l.b16 %v75
    %v133 = vunpack.c.l.b16 %v76
    %v134 = vunpack.c.l.b16 %v77
    %v135 = vunpack.c.l.b16 %v78
    %v136 = vunpack.c.l.b16 %v79
    %v137 = vunpack.c.l.b16 %v80
    %v138 = vunpack.c.l.b16 %v81
    %v139 = vunpack.c.l.b16 %v82
    %v140 = vunpack.c.l.b16 %v83
    %v141 = vunpack.c.l.b16 %v84
    %v142 = vunpack.c.l.b16 %v85
    %v143 = vunpack.c.l.b16 %v86
    %v144 = vunpack.c.l.b16 %v87
    %v145 = vunpack.c.l.b16 %v88
    %v146 = vpack.c.b16 %v122, %v121
    %v147 = vpack.c.b16 %v124, %v123
    %v148 = vpack.c.b16 %v126, %v125
    %v149 = vpack.c.b16 %v128, %v127
    %v150 = vpack.c.b16 %v130, %v129
    %v151 = vpack.c.b16 %v132, %v131
    %v152 = vpack.c.b16 %v134, %v133
    %v153 = vpack.c.b16 %v136, %v135
    %v154 = vpack.c.b16 %v138, %v137
    %v155 = vpack.c.b16 %v140, %v139
    %v156 = vpack.c.b16 %v142, %v141
    %v157 = vpack.c.b16 %v144, %v143
    %v158 = vpack.c.b16 %v145, %v145
    %vm171 = vcmask 588800
    %v173 = vsel %vm171, %v63, 0
    %vm175 = vcmask 1043456
    %v177 = vsel %vm175, %v158, 0
    %179 = vmatprep.subr.bf16.mxu0 0
    %180 = vmatpush1.bf16.msra.mxu0 %v146
    %181 = vmatprep.subr.bf16.mxu0 0
    %182 = vmatpush1.bf16.msra.mxu0 %v147
    %183 = vmatprep.subr.bf16.mxu0 0
    %184 = vmatpush1.bf16.msra.mxu0 %v148
    %185 = vmatprep.subr.bf16.mxu0 0
    %186 = vmatpush1.bf16.msra.mxu0 %v149
    %187 = vmatprep.subr.bf16.mxu0 0
    %188 = vmatpush1.bf16.msra.mxu0 %v150
    %189 = vmatprep.subr.bf16.mxu0 0
    %190 = vmatpush1.bf16.msra.mxu0 %v151
    %191 = vmatprep.subr.bf16.mxu0 0
    %192 = vmatpush1.bf16.msra.mxu0 %v152
    %193 = vmatprep.subr.bf16.mxu0 0
    %194 = vmatpush1.bf16.msra.mxu0 %v153
    %195 = vmatprep.subr.bf16.mxu0 0
    %196 = vmatpush1.bf16.msra.mxu0 %v154
    %197 = vmatprep.subr.bf16.mxu0 0
    %198 = vmatpush1.bf16.msra.mxu0 %v155
    %199 = vmatprep.subr.bf16.mxu0 0
    %200 = vmatpush1.bf16.msra.mxu0 %v156
    %201 = vmatprep.subr.bf16.mxu0 0
    %202 = vmatpush1.bf16.msra.mxu0 %v157
    %203 = vmatprep.subr.bf16.mxu0 0
    %204 = vmatpush1.bf16.msra.mxu0 %v177
    %205 = vmatprep.subr.bf16.mxu0 0
    %206 = vmatpush1.bf16.msra.mxu0 0
    %207 = vmatprep.subr.bf16.mxu0 0
    %208 = vmatpush1.bf16.msra.mxu0 0
    %209 = vmatprep.subr.bf16.mxu0 0
    %210 = vmatpush1.bf16.msra.mxu0 0
    %211 = vmatprep.mubr.bf16.mxu0 %v173
    %212 = vmatmul.mubr.bf16.gmra.mrb[0].mxu0 %v62
    %v213 = vpop.f32.mrb[0].mxu0
    %v214 = vadd.f32 %v94, %v213
    %v215 = vpop.f32.mrb[0].mxu0
    %v216 = vpop.f32.mrb[0].mxu0
    %v217 = vpop.f32.mrb[0].mxu0
    %218 = vdwg.mxu0
    %v219 = vmax.f32 %v214, 0.0
    %v220 = vpack.c.bf16 %v219, %v219
    %v221 = vld [vmem:[#allocation6] sm:$0xf]
    %v222 = vld [vmem:[#allocation6 + $0x4] sm:$0xf]
    %v223 = vld [vmem:[#allocation6 + $0x8] sm:$0xf]
    %v224 = vld [vmem:[#allocation6 + $0xc] sm:$0xf]
    %v225 = vld [vmem:[#allocation6 + $0x10] sm:$0xf]
    %v226 = vld [vmem:[#allocation6 + $0x14] sm:$0xf]
    %v227 = vld [vmem:[#allocation6 + $0x18] sm:$0xf]
    %v228 = vld [vmem:[#allocation6 + $0x1c] sm:$0xf]
    %v229 = vld [vmem:[#allocation6 + $0x20] sm:$0xf]
    %v230 = vld [vmem:[#allocation6 + $0x24] sm:$0xf]
    %v231 = vld [vmem:[#allocation6 + $0x28] sm:$0xf]
    %v232 = vld [vmem:[#allocation6 + $0x2c] sm:$0xf]
    %v233 = vld [vmem:[#allocation6 + $0x30] sm:$0xf]
    %v234 = vld [vmem:[#allocation6 + $0x34] sm:$0xf]
    %v235 = vld [vmem:[#allocation6 + $0x38] sm:$0xf]
    %v236 = vld [vmem:[#allocation6 + $0x3c] sm:$0xf]
    %v237 = vld [vmem:[%s4] sm:$0x1]
    %v239 = vlaneseq
    %v240 = vshrl.u32 %v239, 7
    %v241 = vsub.s32 0, %v240
    %v242 = vrot.slane %v237, %v241
    %v260 = vunpack.c.l.b16 %v221
    %v261 = vunpack.c.l.b16 %v222
    %v262 = vunpack.c.l.b16 %v223
    %v263 = vunpack.c.l.b16 %v224
    %v264 = vunpack.c.l.b16 %v225
    %v265 = vunpack.c.l.b16 %v226
    %v266 = vunpack.c.l.b16 %v227
    %v267 = vunpack.c.l.b16 %v228
    %v268 = vunpack.c.l.b16 %v229
    %v269 = vunpack.c.l.b16 %v230
    %v270 = vunpack.c.l.b16 %v231
    %v271 = vunpack.c.l.b16 %v232
    %v272 = vunpack.c.l.b16 %v233
    %v273 = vunpack.c.l.b16 %v234
    %v274 = vunpack.c.l.b16 %v235
    %v275 = vunpack.c.l.b16 %v236
    %v276 = vpack.c.b16 %v261, %v260
    %v277 = vpack.c.b16 %v263, %v262
    %v278 = vpack.c.b16 %v265, %v264
    %v279 = vpack.c.b16 %v267, %v266
    %v280 = vpack.c.b16 %v269, %v268
    %v281 = vpack.c.b16 %v271, %v270
    %v282 = vpack.c.b16 %v273, %v272
    %v283 = vpack.c.b16 %v275, %v274
    %292 = vmatprep.subr.bf16.mxu0 0
    %293 = vmatpush1.bf16.msra.mxu0 %v276
    %294 = vmatprep.subr.bf16.mxu0 0
    %295 = vmatpush1.bf16.msra.mxu0 %v277
    %296 = vmatprep.subr.bf16.mxu0 0
    %297 = vmatpush1.bf16.msra.mxu0 %v278
    %298 = vmatprep.subr.bf16.mxu0 0
    %299 = vmatpush1.bf16.msra.mxu0 %v279
    %300 = vmatprep.subr.bf16.mxu0 0
    %301 = vmatpush1.bf16.msra.mxu0 %v280
    %302 = vmatprep.subr.bf16.mxu0 0
    %303 = vmatpush1.bf16.msra.mxu0 %v281
    %304 = vmatprep.subr.bf16.mxu0 0
    %305 = vmatpush1.bf16.msra.mxu0 %v282
    %306 = vmatprep.subr.bf16.mxu0 0
    %307 = vmatpush1.bf16.msra.mxu0 %v283
    %308 = vmatprep.subr.bf16.mxu0 0
    %309 = vmatpush1.bf16.msra.mxu0 0
    %310 = vmatprep.subr.bf16.mxu0 0
    %311 = vmatpush1.bf16.msra.mxu0 0
    %312 = vmatprep.subr.bf16.mxu0 0
    %313 = vmatpush1.bf16.msra.mxu0 0
    %314 = vmatprep.subr.bf16.mxu0 0
    %315 = vmatpush1.bf16.msra.mxu0 0
    %316 = vmatprep.subr.bf16.mxu0 0
    %317 = vmatpush1.bf16.msra.mxu0 0
    %318 = vmatprep.subr.bf16.mxu0 0
    %319 = vmatpush1.bf16.msra.mxu0 0
    %320 = vmatprep.subr.bf16.mxu0 0
    %321 = vmatpush1.bf16.msra.mxu0 0
    %322 = vmatprep.subr.bf16.mxu0 0
    %323 = vmatpush1.bf16.msra.mxu0 0
    %324 = vmatprep.mubr.bf16.mxu0 0
    %325 = vmatmul.mubr.bf16.gmra.mrb[0].mxu0 %v220
    %v326 = vpop.f32.mrb[0].mxu0
    %v327 = vadd.f32 %v242, %v326
    %v328 = vpop.f32.mrb[0].mxu0
    %v329 = vpop.f32.mrb[0].mxu0
    %v330 = vpop.f32.mrb[0].mxu0
    %331 = vdwg.mxu0
    %332 = vmax.xlane.f32.xlu0 %v327
    %v333 = vpop.xlane.xlu0 %332
    %v334 = vsub.f32 %v327, %v333
    %v335 = vmul.f32 %v334, 1.442695
    %v336 = vpow.pop %v335
    %337 = vadd.xlane.f32.xlu0 %v336
    %v338 = vpop.xlane.xlu0 %337
    %v339 = vrcp.pop %v338
    %v340 = vmul.f32 %v336, %v339
    %vm341 = vcmask 31744
    %342 = vst.msk [vmem:[%s5] sm:$0xff] %vm341, %v340
    // Predicated region
    $region34: #{dcd_forward.1} parent=1 // pred_check
      _
    $region35: #{dcd_forward.1} parent=1 // pred_check_branch
      %344 = sbr.rel (0) target = $region37
    $region36: #{dcd_forward.1} parent=1 // pred_region
      _
    $region37: #{dcd_forward.1} parent=1 // pred_fallthru
      _
    // Predicated region
    $region38: #{dcd_forward.1} parent=1 // pred_check
      _
    $region39: #{dcd_forward.1} parent=1 // pred_check_branch
      %346 = sbr.rel (0) target = $region41
    $region40: #{dcd_forward.1} parent=1 // pred_region
      _
    $region41: #{dcd_forward.1} parent=1 // pred_fallthru
      _
    %347 = vsyncpa [#allocation3], 1
    %348 = vsyncpa [#allocation5], 1

</llo_original>
